<compile_context>
chip_gen: v7x
topology: tpu7x:2x2x1
jax: 0.10.0
libtpu: 0.0.40
codegen_flags: <defaults>
</compile_context>

<pallas_src>
import jax
import jax.numpy as jnp
from jax.experimental import pallas as pl
from jax.experimental.pallas import tpu as pltpu


def mlp_kernel(x_ref, w1_ref, b1_ref, w2_ref, b2_ref, w3_ref, b3_ref, o_ref):
    # One batch tile per grid step: three MXU matmuls + VPU bias/ReLU, all
    # f32-accumulated. Weights/biases are tiny resident VMEM blocks.
    x = x_ref[...]
    h1 = jnp.dot(x, w1_ref[...], preferred_element_type=jnp.float32) + b1_ref[...]
    h1 = jnp.maximum(h1, 0.0)
    h2 = jnp.dot(h1, w2_ref[...], preferred_element_type=jnp.float32) + b2_ref[...]
    h2 = jnp.maximum(h2, 0.0)
    out = jnp.dot(h2, w3_ref[...], preferred_element_type=jnp.float32) + b3_ref[...]
    o_ref[...] = out.astype(o_ref.dtype)


def _round_up(n, m):
    return ((n + m - 1) // m) * m


def ann_model_forward(x, params, *, block_m=1024):
    """Pallas forward for ANN_Model: Linear(19->20) ReLU, Linear(20->20) ReLU, Linear(20->2).

    Tiles the batch dimension (TM rows per grid step, sublane-aligned); weights
    and biases stay resident in VMEM across all steps.
    """
    w1, b1, w2, b2, w3, b3 = params
    batch = x.shape[0]
    in_features = w1.shape[0]
    out_features = w3.shape[1]

    # Sublane-aligned batch tile; small batches collapse to a single block.
    tm = min(block_m, _round_up(max(batch, 1), 8))
    padded = _round_up(batch, tm)
    if padded != batch:
        x = jnp.pad(x, ((0, padded - batch), (0, 0)))
    grid = (padded // tm,)

    # Advisory cost estimate so XLA doesn't treat the call as opaque.
    flops = 2 * padded * (
        in_features * w1.shape[1] + w2.shape[0] * w2.shape[1] + w3.shape[0] * out_features
    )
    weight_bytes = sum(int(p.size) * p.dtype.itemsize for p in (w1, b1, w2, b2, w3, b3))
    bytes_accessed = padded * (in_features + out_features) * 4 + weight_bytes

    out = pl.pallas_call(
        mlp_kernel,
        out_shape=jax.ShapeDtypeStruct((padded, out_features), jnp.float32),
        grid=grid,
        in_specs=[
            pl.BlockSpec((tm, in_features), lambda i: (i, 0)),   # x: streamed per tile
            pl.BlockSpec(w1.shape, lambda i: (0, 0)),            # weights/biases: resident
            pl.BlockSpec(b1.shape, lambda i: (0, 0)),
            pl.BlockSpec(w2.shape, lambda i: (0, 0)),
            pl.BlockSpec(b2.shape, lambda i: (0, 0)),
            pl.BlockSpec(w3.shape, lambda i: (0, 0)),
            pl.BlockSpec(b3.shape, lambda i: (0, 0)),
        ],
        out_specs=pl.BlockSpec((tm, out_features), lambda i: (i, 0)),
        compiler_params=pltpu.CompilerParams(
            dimension_semantics=("parallel",),
        ),
        cost_estimate=pl.CostEstimate(
            flops=flops, transcendentals=0, bytes_accessed=bytes_accessed
        ),
    )(x, w1, b1, w2, b2, w3, b3)
    return out[:batch]


def init_params(key, input_features=19, hidden1=20, hidden2=20, out_features=2):
    """Deterministic init mimicking PyTorch nn.Linear default (U(-1/sqrt(fan_in), 1/sqrt(fan_in))).

    Weights are stored already transposed to (in, out); biases as (1, out) for TPU layout.
    """
    ks = jax.random.split(key, 6)

    def linear(kw, kb, fan_in, fan_out):
        bound = 1.0 / jnp.sqrt(jnp.float32(fan_in))
        w = jax.random.uniform(kw, (fan_in, fan_out), jnp.float32, -bound, bound)
        b = jax.random.uniform(kb, (1, fan_out), jnp.float32, -bound, bound)
        return w, b

    w1, b1 = linear(ks[0], ks[1], input_features, hidden1)
    w2, b2 = linear(ks[2], ks[3], hidden1, hidden2)
    w3, b3 = linear(ks[4], ks[5], hidden2, out_features)
    return (w1, b1, w2, b2, w3, b3)


def reference_forward(x, params):
    w1, b1, w2, b2, w3, b3 = params
    h1 = jnp.maximum(x @ w1 + b1, 0.0)
    h2 = jnp.maximum(h1 @ w2 + b2, 0.0)
    return h2 @ w3 + b3


if __name__ == "__main__":
    key = jax.random.PRNGKey(0)
    k_x, k_x2, k_p = jax.random.split(key, 3)

    input_features = 19
    params = init_params(k_p, input_features=input_features, hidden1=20, hidden2=20, out_features=2)

    # Small primary check (single tile).
    batch = 8
    x = jax.random.normal(k_x, (batch, input_features), dtype=jnp.float32)
    out = jax.block_until_ready(ann_model_forward(x, params))
    ref = reference_forward(x, params)
    assert out.shape == (batch, 2)
    assert jnp.allclose(out, ref, atol=1e-5, rtol=1e-5)

    # Secondary check exercising the multi-tile grid + ragged-batch padding path.
    batch2 = 200
    x2 = jax.random.normal(k_x2, (batch2, input_features), dtype=jnp.float32)
    out2 = jax.block_until_ready(ann_model_forward(x2, params, block_m=64))
    ref2 = reference_forward(x2, params)
    assert out2.shape == (batch2, 2)
    assert jnp.allclose(out2, ref2, atol=1e-5, rtol=1e-5)

    print("KERNEL_OK")
</pallas_src>

<mosaic_0001>
module attributes {stable_mosaic.version = 11 : i64} {
  func.func @mlp_kernel(%arg0: i32, %arg1: memref<8x19xf32, #tpu.memory_space<vmem>>, %arg2: memref<19x20xf32, #tpu.memory_space<vmem>>, %arg3: memref<1x20xf32, #tpu.memory_space<vmem>>, %arg4: memref<20x20xf32, #tpu.memory_space<vmem>>, %arg5: memref<1x20xf32, #tpu.memory_space<vmem>>, %arg6: memref<20x2xf32, #tpu.memory_space<vmem>>, %arg7: memref<1x2xf32, #tpu.memory_space<vmem>>, %arg8: memref<8x2xf32, #tpu.memory_space<vmem>>) attributes {dimension_semantics = [#tpu.dimension_semantics<parallel>], iteration_bounds = array<i64: 1>, scalar_prefetch = 0 : i64, scratch_operands = 0 : i64, tpu.core_type = #tpu.core_type<tc>, window_params = [{transform_indices = @transform_0, window_bounds = array<i64: 8, 19>}, {pipeline_mode = #tpu.pipeline_mode<synchronous>, transform_indices = @transform_1, window_bounds = array<i64: 19, 20>}, {pipeline_mode = #tpu.pipeline_mode<synchronous>, transform_indices = @transform_2, window_bounds = array<i64: 1, 20>}, {pipeline_mode = #tpu.pipeline_mode<synchronous>, transform_indices = @transform_3, window_bounds = array<i64: 20, 20>}, {pipeline_mode = #tpu.pipeline_mode<synchronous>, transform_indices = @transform_4, window_bounds = array<i64: 1, 20>}, {pipeline_mode = #tpu.pipeline_mode<synchronous>, transform_indices = @transform_5, window_bounds = array<i64: 20, 2>}, {pipeline_mode = #tpu.pipeline_mode<synchronous>, transform_indices = @transform_6, window_bounds = array<i64: 1, 2>}, {transform_indices = @transform_7, window_bounds = array<i64: 8, 2>}]} {
    %c0 = arith.constant 0 : index
    %c0_0 = arith.constant 0 : index
    %0 = vector.load %arg1[%c0, %c0_0] : memref<8x19xf32, #tpu.memory_space<vmem>>, vector<8x19xf32>
    %c0_1 = arith.constant 0 : index
    %c0_2 = arith.constant 0 : index
    %1 = vector.load %arg2[%c0_1, %c0_2] : memref<19x20xf32, #tpu.memory_space<vmem>>, vector<19x20xf32>
    %cst = arith.constant dense<0.000000e+00> : vector<8x20xf32>
    %2 = tpu.matmul %0, %1, %cst {dimension_numbers = #tpu.dot_dimension_numbers<[1], [0], [0], [1], [0, 0, 1, 1], [], []>} : vector<8x19xf32>, vector<19x20xf32>, vector<8x20xf32> -> vector<8x20xf32>
    %c0_3 = arith.constant 0 : index
    %c0_4 = arith.constant 0 : index
    %3 = vector.load %arg3[%c0_3, %c0_4] : memref<1x20xf32, #tpu.memory_space<vmem>>, vector<1x20xf32>
    %4 = vector.broadcast %3 : vector<1x20xf32> to vector<8x20xf32>
    %5 = arith.addf %2, %4 : vector<8x20xf32>
    %cst_5 = arith.constant 0.000000e+00 : f32
    %6 = vector.broadcast %cst_5 : f32 to vector<8x20xf32>
    %7 = arith.maximumf %5, %6 : vector<8x20xf32>
    %c0_6 = arith.constant 0 : index
    %c0_7 = arith.constant 0 : index
    %8 = vector.load %arg4[%c0_6, %c0_7] : memref<20x20xf32, #tpu.memory_space<vmem>>, vector<20x20xf32>
    %cst_8 = arith.constant dense<0.000000e+00> : vector<8x20xf32>
    %9 = tpu.matmul %7, %8, %cst_8 {dimension_numbers = #tpu.dot_dimension_numbers<[1], [0], [0], [1], [0, 0, 1, 1], [], []>} : vector<8x20xf32>, vector<20x20xf32>, vector<8x20xf32> -> vector<8x20xf32>
    %c0_9 = arith.constant 0 : index
    %c0_10 = arith.constant 0 : index
    %10 = vector.load %arg5[%c0_9, %c0_10] : memref<1x20xf32, #tpu.memory_space<vmem>>, vector<1x20xf32>
    %11 = vector.broadcast %10 : vector<1x20xf32> to vector<8x20xf32>
    %12 = arith.addf %9, %11 : vector<8x20xf32>
    %cst_11 = arith.constant 0.000000e+00 : f32
    %13 = vector.broadcast %cst_11 : f32 to vector<8x20xf32>
    %14 = arith.maximumf %12, %13 : vector<8x20xf32>
    %c0_12 = arith.constant 0 : index
    %c0_13 = arith.constant 0 : index
    %15 = vector.load %arg6[%c0_12, %c0_13] : memref<20x2xf32, #tpu.memory_space<vmem>>, vector<20x2xf32>
    %cst_14 = arith.constant dense<0.000000e+00> : vector<8x2xf32>
    %16 = tpu.matmul %14, %15, %cst_14 {dimension_numbers = #tpu.dot_dimension_numbers<[1], [0], [0], [1], [0, 0, 1, 1], [], []>} : vector<8x20xf32>, vector<20x2xf32>, vector<8x2xf32> -> vector<8x2xf32>
    %c0_15 = arith.constant 0 : index
    %c0_16 = arith.constant 0 : index
    %17 = vector.load %arg7[%c0_15, %c0_16] : memref<1x2xf32, #tpu.memory_space<vmem>>, vector<1x2xf32>
    %18 = vector.broadcast %17 : vector<1x2xf32> to vector<8x2xf32>
    %19 = arith.addf %16, %18 : vector<8x2xf32>
    %c0_17 = arith.constant 0 : index
    %c0_18 = arith.constant 0 : index
    %20 = vector.load %arg8[%c0_17, %c0_18] : memref<8x2xf32, #tpu.memory_space<vmem>>, vector<8x2xf32>
    tpu.vector_store %arg8[%c0_17, %c0_18], %19 {strides = array<i32>} : memref<8x2xf32, #tpu.memory_space<vmem>>, vector<8x2xf32>,
    return
  }
  func.func @transform_0(%arg0: i32) -> (i32, i32) {
    %c0_i32 = arith.constant 0 : i32
    %c0_i32_0 = arith.constant 0 : i32
    return %arg0, %c0_i32 : i32, i32
  }
  func.func @transform_1(%arg0: i32) -> (i32, i32) {
    %c0_i32 = arith.constant 0 : i32
    %c0_i32_0 = arith.constant 0 : i32
    %c0_i32_1 = arith.constant 0 : i32
    return %c0_i32, %c0_i32_0 : i32, i32
  }
  func.func @transform_2(%arg0: i32) -> (i32, i32) {
    %c0_i32 = arith.constant 0 : i32
    %c0_i32_0 = arith.constant 0 : i32
    %c0_i32_1 = arith.constant 0 : i32
    return %c0_i32, %c0_i32_0 : i32, i32
  }
  func.func @transform_3(%arg0: i32) -> (i32, i32) {
    %c0_i32 = arith.constant 0 : i32
    %c0_i32_0 = arith.constant 0 : i32
    %c0_i32_1 = arith.constant 0 : i32
    return %c0_i32, %c0_i32_0 : i32, i32
  }
  func.func @transform_4(%arg0: i32) -> (i32, i32) {
    %c0_i32 = arith.constant 0 : i32
    %c0_i32_0 = arith.constant 0 : i32
    %c0_i32_1 = arith.constant 0 : i32
    return %c0_i32, %c0_i32_0 : i32, i32
  }
  func.func @transform_5(%arg0: i32) -> (i32, i32) {
    %c0_i32 = arith.constant 0 : i32
    %c0_i32_0 = arith.constant 0 : i32
    %c0_i32_1 = arith.constant 0 : i32
    return %c0_i32, %c0_i32_0 : i32, i32
  }
  func.func @transform_6(%arg0: i32) -> (i32, i32) {
    %c0_i32 = arith.constant 0 : i32
    %c0_i32_0 = arith.constant 0 : i32
    %c0_i32_1 = arith.constant 0 : i32
    return %c0_i32, %c0_i32_0 : i32, i32
  }
  func.func @transform_7(%arg0: i32) -> (i32, i32) {
    %c0_i32 = arith.constant 0 : i32
    %c0_i32_0 = arith.constant 0 : i32
    return %arg0, %c0_i32 : i32, i32
  }
}

</mosaic_0001>

<llo_original>
// kernel: tpu_custom_call.1
$region0: #{tpu_custom_call.1}
  #allocation0 [shape = 'u32[]', space=smem, size = 0x4, offset = 0x4, fixed_abs, tag = 'smem constant byte address 0x4 - core index']
  #allocation1 [shape = 'u32[144,128]{1,0:T(1,128)}', space=vmem, size = 0x12000, scoped, tag = 'internal scratch']
  %s0 = inlined_call_operand.hbm [shape: f32[8,19], index: 0, kind: input, shape index: {}]
  %s1 = inlined_call_operand.vmem [shape: f32[19,20], index: 1, kind: input, shape index: {}]
  %s2 = inlined_call_operand.vmem [shape: f32[1,20], index: 2, kind: input, shape index: {}]
  %s3 = inlined_call_operand.hbm [shape: f32[20,20], index: 3, kind: input, shape index: {}]
  %s4 = inlined_call_operand.vmem [shape: f32[1,20], index: 4, kind: input, shape index: {}]
  %s5 = inlined_call_operand.vmem [shape: f32[20,2], index: 5, kind: input, shape index: {}]
  %s6 = inlined_call_operand.vmem [shape: f32[1,2], index: 6, kind: input, shape index: {}]
  %s7 = inlined_call_operand.vmem [shape: f32[8,2], index: 7, kind: output, shape index: {}]
  %s8 = sld [smem:[#allocation0]]
  $region46: #{tpu_custom_call.1} parent=0
    _
  %s10 = ssub.s32 1, %s8
  %s11 = scalar_select 0, %s10, %s8
  $region1: #{tpu_custom_call.1} parent=0
    #allocation2 [shape = 'u8[4096]{0}', space=vmem, size = 0x1000, scoped, tag = 'input window, operand 0, single buffered']
    #allocation3 [shape = 's32[1]{0}', space=sflag, size = 0x4, scoped, tag = 'scoped memory for tpu_custom_call.1']
    #allocation4 [shape = 'u8[12288]{0}', space=vmem, size = 0x3000, scoped, tag = 'input window, operand 3, single buffered']
    #allocation5 [shape = 's32[1]{0}', space=sflag, size = 0x4, scoped, tag = 'scoped memory for tpu_custom_call.1']
    %12 = vsyncpa [#allocation3], 0
    %13 = vsyncpa [#allocation5], 0
    // Predicated region
    $region2: #{tpu_custom_call.1} parent=1 // pred_check
      _
    $region3: #{tpu_custom_call.1} parent=1 // pred_check_branch
      %15 = sbr.rel (0) target = $region5
    $region4: #{tpu_custom_call.1} parent=1 // pred_region
      %s17 = ssub.s32 128, 128
      %18 = vsyncadd [#allocation3], %s17
      %s20 = sshll.u32 [#allocation2], 4
      %s21 = int_to_ptr.vmem [resolvable:$true] %s20
      %23 = dma.hbm_to_vmem [thread:$0]  %s0, 128, %s21, [#allocation3]
    $region5: #{tpu_custom_call.1} parent=1 // pred_fallthru
      _
    // Predicated region
    $region6: #{tpu_custom_call.1} parent=1 // pred_check
      _
    $region7: #{tpu_custom_call.1} parent=1 // pred_check_branch
      %25 = sbr.rel (0) target = $region9
    $region8: #{tpu_custom_call.1} parent=1 // pred_region
      _
    $region9: #{tpu_custom_call.1} parent=1 // pred_fallthru
      _
    // Predicated region
    $region10: #{tpu_custom_call.1} parent=1 // pred_check
      _
    $region11: #{tpu_custom_call.1} parent=1 // pred_check_branch
      %27 = sbr.rel (0) target = $region13
    $region12: #{tpu_custom_call.1} parent=1 // pred_region
      _
    $region13: #{tpu_custom_call.1} parent=1 // pred_fallthru
      _
    // Predicated region
    $region14: #{tpu_custom_call.1} parent=1 // pred_check
      _
    $region15: #{tpu_custom_call.1} parent=1 // pred_check_branch
      %29 = sbr.rel (0) target = $region17
    $region16: #{tpu_custom_call.1} parent=1 // pred_region
      %s31 = ssub.s32 384, 384
      %32 = vsyncadd [#allocation5], %s31
      %s33 = sshll.u32 [#allocation4], 4
      %s34 = int_to_ptr.vmem [resolvable:$true] %s33
      %39 = dma.hbm_to_vmem [thread:$0]  %s3, 384, %s34, [#allocation5], 128, 128, 8
    $region17: #{tpu_custom_call.1} parent=1 // pred_fallthru
      _
    // Predicated region
    $region18: #{tpu_custom_call.1} parent=1 // pred_check
      _
    $region19: #{tpu_custom_call.1} parent=1 // pred_check_branch
      %41 = sbr.rel (0) target = $region21
    $region20: #{tpu_custom_call.1} parent=1 // pred_region
      _
    $region21: #{tpu_custom_call.1} parent=1 // pred_fallthru
      _
    // Predicated region
    $region22: #{tpu_custom_call.1} parent=1 // pred_check
      _
    $region23: #{tpu_custom_call.1} parent=1 // pred_check_branch
      %43 = sbr.rel (0) target = $region25
    $region24: #{tpu_custom_call.1} parent=1 // pred_region
      _
    $region25: #{tpu_custom_call.1} parent=1 // pred_fallthru
      _
    // Predicated region
    $region26: #{tpu_custom_call.1} parent=1 // pred_check
      _
    $region27: #{tpu_custom_call.1} parent=1 // pred_check_branch
      %45 = sbr.rel (0) target = $region29
    $region28: #{tpu_custom_call.1} parent=1 // pred_region
      _
    $region29: #{tpu_custom_call.1} parent=1 // pred_fallthru
      _
    // Predicated region
    $region30: #{tpu_custom_call.1} parent=1 // pred_check
      _
    $region31: #{tpu_custom_call.1} parent=1 // pred_check_branch
      %47 = sbr.rel (0) target = $region33
    $region32: #{tpu_custom_call.1} parent=1 // pred_region
      %48 = dma.done [#allocation3], 128
    $region33: #{tpu_custom_call.1} parent=1 // pred_fallthru
      _
    // Predicated region
    $region34: #{tpu_custom_call.1} parent=1 // pred_check
      _
    $region35: #{tpu_custom_call.1} parent=1 // pred_check_branch
      %50 = sbr.rel (0) target = $region37
    $region36: #{tpu_custom_call.1} parent=1 // pred_region
      %51 = dma.done [#allocation5], 384
    $region37: #{tpu_custom_call.1} parent=1 // pred_fallthru
      _
    %v52 = vld [vmem:[#allocation2] sm:$0xff]
    %v53 = vld [vmem:[%s1] sm:$0xff]
    %v54 = vld [vmem:[%s1 + $0x8] sm:$0xff]
    %v55 = vld [vmem:[%s1 + $0x10] sm:$0x7]
    %v56 = vld [vmem:[%s2] sm:$0x1]
    %v58 = vlaneseq
    %v59 = vshrl.u32 %v58, 7
    %v60 = vsub.s32 0, %v59
    %v61 = vrot.slane %v56, %v60
    %vm63 = vcmask 154624
    %v65 = vsel %vm63, %v52, 0
    %vm67 = vcmask 1042432
    %v69 = vsel %vm67, %v55, 0
    %71 = vmatprep.subr.mxu0 0.0
    %72 = vmatpush1.msra.mxu0 %v53
    %73 = vmatprep.subr.mxu0 0.0
    %74 = vmatpush1.msra.mxu0 %v54
    %75 = vmatprep.subr.mxu0 0.0
    %76 = vmatpush1.msra.mxu0 %v69
    %77 = vmatprep.subr.mxu0 0.0
    %78 = vmatpush1.msra.mxu0 0.0
    %79 = vmatprep.subr.mxu0 0.0
    %80 = vmatpush1.msra.mxu0 0.0
    %81 = vmatprep.subr.mxu0 0.0
    %82 = vmatpush1.msra.mxu0 0.0
    %83 = vmatprep.subr.mxu0 0.0
    %84 = vmatpush1.msra.mxu0 0.0
    %85 = vmatprep.subr.mxu0 0.0
    %86 = vmatpush1.msra.mxu0 0.0
    %87 = vmatprep.subr.mxu0 0.0
    %88 = vmatpush1.msra.mxu0 0.0
    %89 = vmatprep.subr.mxu0 0.0
    %90 = vmatpush1.msra.mxu0 0.0
    %91 = vmatprep.subr.mxu0 0.0
    %92 = vmatpush1.msra.mxu0 0.0
    %93 = vmatprep.subr.mxu0 0.0
    %94 = vmatpush1.msra.mxu0 0.0
    %95 = vmatprep.subr.mxu0 0.0
    %96 = vmatpush1.msra.mxu0 0.0
    %97 = vmatprep.subr.mxu0 0.0
    %98 = vmatpush1.msra.mxu0 0.0
    %99 = vmatprep.subr.mxu0 0.0
    %100 = vmatpush1.msra.mxu0 0.0
    %101 = vmatprep.subr.mxu0 0.0
    %102 = vmatpush1.msra.mxu0 0.0
    %103 = vmatprep.subr.mxu0 0.0
    %104 = vmatpush1.msra.mxu0 0.0
    %105 = vmatprep.subr.mxu0 0.0
    %106 = vmatpush1.msra.mxu0 0.0
    %107 = vmatprep.subr.mxu0 0.0
    %108 = vmatpush1.msra.mxu0 0.0
    %109 = vmatprep.subr.mxu0 0.0
    %110 = vmatpush1.msra.mxu0 0.0
    %111 = vmatprep.subr.mxu0 0.0
    %112 = vmatpush1.msra.mxu0 0.0
    %113 = vmatprep.subr.mxu0 0.0
    %114 = vmatpush1.msra.mxu0 0.0
    %115 = vmatprep.subr.mxu0 0.0
    %116 = vmatpush1.msra.mxu0 0.0
    %117 = vmatprep.subr.mxu0 0.0
    %118 = vmatpush1.msra.mxu0 0.0
    %119 = vmatprep.subr.mxu0 0.0
    %120 = vmatpush1.msra.mxu0 0.0
    %121 = vmatprep.subr.mxu0 0.0
    %122 = vmatpush1.msra.mxu0 0.0
    %123 = vmatprep.subr.mxu0 0.0
    %124 = vmatpush1.msra.mxu0 0.0
    %125 = vmatprep.subr.mxu0 0.0
    %126 = vmatpush1.msra.mxu0 0.0
    %127 = vmatprep.subr.mxu0 0.0
    %128 = vmatpush1.msra.mxu0 0.0
    %129 = vmatprep.subr.mxu0 0.0
    %130 = vmatpush1.msra.mxu0 0.0
    %131 = vmatprep.subr.mxu0 0.0
    %132 = vmatpush1.msra.mxu0 0.0
    %133 = vmatprep.subr.mxu0 0.0
    %134 = vmatpush1.msra.mxu0 0.0
    %135 = vmatprep.mubr.f32.mxu0 0.0
    %136 = vmatmul.mubr.f32.gmra.mrb[0].mxu0 %v65
    %v137 = vpop.f32.mrb[0].mxu0
    %v138 = vadd.f32 %v61, %v137
    %v139 = vpop.f32.mrb[0].mxu0
    %140 = vdwg.mxu0
    %v141 = vmax.f32 %v138, 0.0
    %v142 = vld [vmem:[#allocation4] sm:$0xff]
    %v143 = vld [vmem:[#allocation4 + $0x8] sm:$0xff]
    %v144 = vld [vmem:[#allocation4 + $0x10] sm:$0xf]
    %v145 = vld [vmem:[%s4] sm:$0x1]
    %v147 = vlaneseq
    %v148 = vshrl.u32 %v147, 7
    %v149 = vsub.s32 0, %v148
    %v150 = vrot.slane %v145, %v149
    %vm152 = vcmask 162816
    %v154 = vsel %vm152, %v141, 0
    %vm156 = vcmask 1043456
    %v158 = vsel %vm156, %v144, 0
    %160 = vmatprep.subr.mxu0 0.0
    %161 = vmatpush1.msra.mxu0 %v142
    %162 = vmatprep.subr.mxu0 0.0
    %163 = vmatpush1.msra.mxu0 %v143
    %164 = vmatprep.subr.mxu0 0.0
    %165 = vmatpush1.msra.mxu0 %v158
    %166 = vmatprep.subr.mxu0 0.0
    %167 = vmatpush1.msra.mxu0 0.0
    %168 = vmatprep.subr.mxu0 0.0
    %169 = vmatpush1.msra.mxu0 0.0
    %170 = vmatprep.subr.mxu0 0.0
    %171 = vmatpush1.msra.mxu0 0.0
    %172 = vmatprep.subr.mxu0 0.0
    %173 = vmatpush1.msra.mxu0 0.0
    %174 = vmatprep.subr.mxu0 0.0
    %175 = vmatpush1.msra.mxu0 0.0
    %176 = vmatprep.subr.mxu0 0.0
    %177 = vmatpush1.msra.mxu0 0.0
    %178 = vmatprep.subr.mxu0 0.0
    %179 = vmatpush1.msra.mxu0 0.0
    %180 = vmatprep.subr.mxu0 0.0
    %181 = vmatpush1.msra.mxu0 0.0
    %182 = vmatprep.subr.mxu0 0.0
    %183 = vmatpush1.msra.mxu0 0.0
    %184 = vmatprep.subr.mxu0 0.0
    %185 = vmatpush1.msra.mxu0 0.0
    %186 = vmatprep.subr.mxu0 0.0
    %187 = vmatpush1.msra.mxu0 0.0
    %188 = vmatprep.subr.mxu0 0.0
    %189 = vmatpush1.msra.mxu0 0.0
    %190 = vmatprep.subr.mxu0 0.0
    %191 = vmatpush1.msra.mxu0 0.0
    %192 = vmatprep.subr.mxu0 0.0
    %193 = vmatpush1.msra.mxu0 0.0
    %194 = vmatprep.subr.mxu0 0.0
    %195 = vmatpush1.msra.mxu0 0.0
    %196 = vmatprep.subr.mxu0 0.0
    %197 = vmatpush1.msra.mxu0 0.0
    %198 = vmatprep.subr.mxu0 0.0
    %199 = vmatpush1.msra.mxu0 0.0
    %200 = vmatprep.subr.mxu0 0.0
    %201 = vmatpush1.msra.mxu0 0.0
    %202 = vmatprep.subr.mxu0 0.0
    %203 = vmatpush1.msra.mxu0 0.0
    %204 = vmatprep.subr.mxu0 0.0
    %205 = vmatpush1.msra.mxu0 0.0
    %206 = vmatprep.subr.mxu0 0.0
    %207 = vmatpush1.msra.mxu0 0.0
    %208 = vmatprep.subr.mxu0 0.0
    %209 = vmatpush1.msra.mxu0 0.0
    %210 = vmatprep.subr.mxu0 0.0
    %211 = vmatpush1.msra.mxu0 0.0
    %212 = vmatprep.subr.mxu0 0.0
    %213 = vmatpush1.msra.mxu0 0.0
    %214 = vmatprep.subr.mxu0 0.0
    %215 = vmatpush1.msra.mxu0 0.0
    %216 = vmatprep.subr.mxu0 0.0
    %217 = vmatpush1.msra.mxu0 0.0
    %218 = vmatprep.subr.mxu0 0.0
    %219 = vmatpush1.msra.mxu0 0.0
    %220 = vmatprep.subr.mxu0 0.0
    %221 = vmatpush1.msra.mxu0 0.0
    %222 = vmatprep.subr.mxu0 0.0
    %223 = vmatpush1.msra.mxu0 0.0
    %224 = vmatprep.mubr.f32.mxu0 0.0
    %225 = vmatmul.mubr.f32.gmra.mrb[0].mxu0 %v154
    %v226 = vpop.f32.mrb[0].mxu0
    %v227 = vadd.f32 %v150, %v226
    %v228 = vpop.f32.mrb[0].mxu0
    %229 = vdwg.mxu0
    %v230 = vmax.f32 %v227, 0.0
    %v231 = vld [vmem:[%s5] sm:$0xff]
    %v232 = vld [vmem:[%s5 + $0x8] sm:$0xff]
    %v233 = vld [vmem:[%s5 + $0x10] sm:$0xf]
    %v234 = vld [vmem:[%s6] sm:$0x1]
    %v236 = vlaneseq
    %v237 = vshrl.u32 %v236, 7
    %v238 = vsub.s32 0, %v237
    %v239 = vrot.slane %v234, %v238
    %v242 = vsel %vm152, %v230, 0
    %v245 = vsel %vm156, %v233, 0
    %247 = vmatprep.subr.mxu0 0.0
    %248 = vmatpush1.msra.mxu0 %v231
    %249 = vmatprep.subr.mxu0 0.0
    %250 = vmatpush1.msra.mxu0 %v232
    %251 = vmatprep.subr.mxu0 0.0
    %252 = vmatpush1.msra.mxu0 %v245
    %253 = vmatprep.subr.mxu0 0.0
    %254 = vmatpush1.msra.mxu0 0.0
    %255 = vmatprep.subr.mxu0 0.0
    %256 = vmatpush1.msra.mxu0 0.0
    %257 = vmatprep.subr.mxu0 0.0
    %258 = vmatpush1.msra.mxu0 0.0
    %259 = vmatprep.subr.mxu0 0.0
    %260 = vmatpush1.msra.mxu0 0.0
    %261 = vmatprep.subr.mxu0 0.0
    %262 = vmatpush1.msra.mxu0 0.0
    %263 = vmatprep.subr.mxu0 0.0
    %264 = vmatpush1.msra.mxu0 0.0
    %265 = vmatprep.subr.mxu0 0.0
    %266 = vmatpush1.msra.mxu0 0.0
    %267 = vmatprep.subr.mxu0 0.0
    %268 = vmatpush1.msra.mxu0 0.0
    %269 = vmatprep.subr.mxu0 0.0
    %270 = vmatpush1.msra.mxu0 0.0
    %271 = vmatprep.subr.mxu0 0.0
    %272 = vmatpush1.msra.mxu0 0.0
    %273 = vmatprep.subr.mxu0 0.0
    %274 = vmatpush1.msra.mxu0 0.0
    %275 = vmatprep.subr.mxu0 0.0
    %276 = vmatpush1.msra.mxu0 0.0
    %277 = vmatprep.subr.mxu0 0.0
    %278 = vmatpush1.msra.mxu0 0.0
    %279 = vmatprep.subr.mxu0 0.0
    %280 = vmatpush1.msra.mxu0 0.0
    %281 = vmatprep.subr.mxu0 0.0
    %282 = vmatpush1.msra.mxu0 0.0
    %283 = vmatprep.subr.mxu0 0.0
    %284 = vmatpush1.msra.mxu0 0.0
    %285 = vmatprep.subr.mxu0 0.0
    %286 = vmatpush1.msra.mxu0 0.0
    %287 = vmatprep.subr.mxu0 0.0
    %288 = vmatpush1.msra.mxu0 0.0
    %289 = vmatprep.subr.mxu0 0.0
    %290 = vmatpush1.msra.mxu0 0.0
    %291 = vmatprep.subr.mxu0 0.0
    %292 = vmatpush1.msra.mxu0 0.0
    %293 = vmatprep.subr.mxu0 0.0
    %294 = vmatpush1.msra.mxu0 0.0
    %295 = vmatprep.subr.mxu0 0.0
    %296 = vmatpush1.msra.mxu0 0.0
    %297 = vmatprep.subr.mxu0 0.0
    %298 = vmatpush1.msra.mxu0 0.0
    %299 = vmatprep.subr.mxu0 0.0
    %300 = vmatpush1.msra.mxu0 0.0
    %301 = vmatprep.subr.mxu0 0.0
    %302 = vmatpush1.msra.mxu0 0.0
    %303 = vmatprep.subr.mxu0 0.0
    %304 = vmatpush1.msra.mxu0 0.0
    %305 = vmatprep.subr.mxu0 0.0
    %306 = vmatpush1.msra.mxu0 0.0
    %307 = vmatprep.subr.mxu0 0.0
    %308 = vmatpush1.msra.mxu0 0.0
    %309 = vmatprep.subr.mxu0 0.0
    %310 = vmatpush1.msra.mxu0 0.0
    %311 = vmatprep.mubr.f32.mxu0 0.0
    %312 = vmatmul.mubr.f32.gmra.mrb[0].mxu0 %v242
    %v313 = vpop.f32.mrb[0].mxu0
    %v314 = vadd.f32 %v239, %v313
    %v315 = vpop.f32.mrb[0].mxu0
    %316 = vdwg.mxu0
    %vm317 = vcmask 15360
    %318 = vst.msk [vmem:[%s7] sm:$0xff] %vm317, %v314
    // Predicated region
    $region38: #{tpu_custom_call.1} parent=1 // pred_check
      _
    $region39: #{tpu_custom_call.1} parent=1 // pred_check_branch
      %320 = sbr.rel (0) target = $region41
    $region40: #{tpu_custom_call.1} parent=1 // pred_region
      _
    $region41: #{tpu_custom_call.1} parent=1 // pred_fallthru
      _
    // Predicated region
    $region42: #{tpu_custom_call.1} parent=1 // pred_check
      _
    $region43: #{tpu_custom_call.1} parent=1 // pred_check_branch
      %322 = sbr.rel (0) target = $region45
    $region44: #{tpu_custom_call.1} parent=1 // pred_region
      _
    $region45: #{tpu_custom_call.1} parent=1 // pred_fallthru
      _
    %323 = vsyncpa [#allocation3], 1
    %324 = vsyncpa [#allocation5], 1

</llo_original>
